<compile_context>
chip_gen: v7x
topology: tpu7x:2x2x1
jax: 0.10.0
libtpu: 0.0.40
codegen_flags: <defaults>
</compile_context>

<pallas_src>
import jax
import jax.numpy as jnp
from jax.experimental import pallas as pl
from jax.experimental.pallas import tpu as pltpu

BN_EPS = 1e-5


def conv1x1_sums_kernel(x_ref, w_ref, psum_ref, psumsq_ref):
    # x_ref:      (B_TILE, C_in, TILE_S)  input dtype (f32) spatial tile, B_TILE samples
    # w_ref:      (C_out, C_in)           conv weight (resident)
    # psum_ref:   (1, B_TILE, C_out, 1)   f32  per-sample sum_s y     (accumulator over j)
    # psumsq_ref: (1, B_TILE, C_out, 1)   f32  per-sample sum_s y*y   (accumulator over j)
    j = pl.program_id(2)

    @pl.when(j == 0)
    def _():
        psum_ref[...] = jnp.zeros_like(psum_ref)
        psumsq_ref[...] = jnp.zeros_like(psumsq_ref)

    # Cast to bf16 on-chip (no extra HBM pass in the wrapper); f32 accumulation.
    w = w_ref[...].astype(jnp.bfloat16)                       # (C_out, C_in)

    b_tile = x_ref.shape[0]                                   # static
    for b in range(b_tile):                                   # small static unroll (<= 8)
        xb = x_ref[b].astype(jnp.bfloat16)                    # (C_in, TILE_S) lane-dense
        # 1x1 conv == channel matmul; spatial stays on the 128-lane axis.
        y = jnp.dot(w, xb, preferred_element_type=jnp.float32)  # (C_out, TILE_S) f32
        psum_ref[0, b] = psum_ref[0, b] + jnp.sum(y, axis=1, keepdims=True)
        psumsq_ref[0, b] = psumsq_ref[0, b] + jnp.sum(y * y, axis=1, keepdims=True)


def _pick_tile_s(s, c_in, itemsize, tile_s=None, target_bytes=2 << 20):
    """Byte-sized spatial tile: multiple of 128 dividing S (or full S)."""
    if tile_s is not None:
        if s % tile_s != 0 or not (tile_s % 128 == 0 or tile_s == s):
            raise ValueError(f"bad tile_s={tile_s} for S={s}")
        return tile_s
    row_bytes = c_in * itemsize                      # bytes per spatial element
    max_elems = max(target_bytes // row_bytes, 128)
    if s <= max_elems:
        return s
    cap = (max_elems // 128) * 128
    for k in range(cap // 128, 0, -1):
        if s % (k * 128) == 0:
            return k * 128
    # TODO(synk): masked ragged last-tile path for huge S not divisible by 128
    # (matters on v7x's 64 MiB VMEM); never hit at the shapes used here.
    return s


def _vmem_limit(x_block_bytes):
    """Derive the scoped-VMEM limit from the buffered x block, generation-aware."""
    try:
        info = pltpu.get_tpu_info()
        phys_vmem = int(getattr(info, "vmem_capacity_bytes", 64 << 20))
    except Exception:
        phys_vmem = 64 << 20                         # conservative (v7x)
    cap = (96 << 20) if phys_vmem >= (100 << 20) else (48 << 20)
    # 2 pipeline buffers of x + headroom for weight/outputs/accumulators.
    return int(min(max(3 * x_block_bytes + (2 << 20), 32 << 20), cap))


def conv1x1_forward(x_nchw, conv_weight, gamma, beta, *,
                    tile_s=None, b_tile=None, n_split=None):
    """x_nchw: (N, C_in, H, W); conv_weight: (C_out, C_in, 1, 1); gamma/beta: (C_out,)."""
    n, c_in, h, w = x_nchw.shape
    c_out = conv_weight.shape[0]
    s_total = h * w
    itemsize = jnp.dtype(x_nchw.dtype).itemsize

    # NCHW read directly as (N, C_in, S): free reshape, no transpose, NO dtype cast
    # (the kernel casts to bf16 on-chip -> no extra HBM pass).
    x3d = x_nchw.reshape(n, c_in, s_total)
    w2d = conv_weight.reshape(c_out, c_in)

    # ---- tiling policy ----
    target_bytes = 2 << 20                            # safe on v7x, good HBM utilization
    tile = _pick_tile_s(s_total, c_in, itemsize, tile_s, target_bytes)
    s_tiles = s_total // tile

    if b_tile is None:
        b_tile = 1
        if tile == s_total:                           # small per-sample S -> batch samples
            per_sample = c_in * s_total * itemsize
            for b in range(1, min(n, 8) + 1):         # cap unroll at 8
                if n % b == 0 and b * per_sample <= target_bytes:
                    b_tile = b
    if n % b_tile != 0:
        raise ValueError(f"b_tile={b_tile} must divide N={n}")
    n_blocks = n // b_tile

    # ---- v7x: give both TensorCores work when the sample axis has one block ----
    if n_split is None:
        n_split = 2 if (n_blocks == 1 and s_tiles % 2 == 0 and s_tiles >= 2) else 1
    if s_tiles % n_split != 0:
        raise ValueError(f"n_split={n_split} must divide s_tiles={s_tiles}")
    spt = s_tiles // n_split                          # spatial tiles per split

    x_block_bytes = b_tile * c_in * tile * itemsize
    vmem_limit = _vmem_limit(x_block_bytes)

    psum, psumsq = pl.pallas_call(
        conv1x1_sums_kernel,
        out_shape=(jax.ShapeDtypeStruct((n_split, n, c_out, 1), jnp.float32),
                   jax.ShapeDtypeStruct((n_split, n, c_out, 1), jnp.float32)),
        grid=(n_split, n_blocks, spt),
        in_specs=[
            pl.BlockSpec((b_tile, c_in, tile), lambda p, i, j: (i, 0, p * spt + j)),
            pl.BlockSpec((c_out, c_in), lambda p, i, j: (0, 0)),
        ],
        out_specs=(
            pl.BlockSpec((1, b_tile, c_out, 1), lambda p, i, j: (p, i, 0, 0)),
            pl.BlockSpec((1, b_tile, c_out, 1), lambda p, i, j: (p, i, 0, 0)),
        ),
        compiler_params=pltpu.CompilerParams(
            dimension_semantics=("parallel", "parallel", "arbitrary"),
            vmem_limit_bytes=vmem_limit),
    )(x3d, w2d)

    # ---- tiny O(N*C_out) finalize: BN affine commutes with the spatial mean ----
    psum2d = jnp.sum(psum, axis=0)[:, :, 0]           # (N, C_out) sum_s y  (combine splits)
    psq2d = jnp.sum(psumsq, axis=0)[:, :, 0]          # (N, C_out) sum_s y^2

    m_total = float(n * s_total)
    mean = jnp.sum(psum2d, axis=0) / m_total                      # (C_out,)
    ex2 = jnp.sum(psq2d, axis=0) / m_total
    var = jnp.maximum(ex2 - mean * mean, 0.0)                     # biased variance
    inv_std = jax.lax.rsqrt(var + BN_EPS)
    pooled = psum2d / float(s_total)                              # per-sample mean of y

    g = gamma.reshape(1, c_out).astype(jnp.float32)
    b = beta.reshape(1, c_out).astype(jnp.float32)
    out = (pooled - mean[None, :]) * (inv_std[None, :] * g) + b   # (N, C_out)

    # PyTorch: (N, C_out, 1, 1) -> .squeeze()
    return jnp.squeeze(out)


def _reference(x_nchw, conv_weight, gamma, beta):
    """Pure-JAX f32 reference mirroring PyTorch training-mode forward."""
    c_out, c_in = conv_weight.shape[0], conv_weight.shape[1]
    w2d = conv_weight.reshape(c_out, c_in)
    y = jnp.einsum('nchw,oc->nohw', x_nchw, w2d)                  # 1x1 conv
    mean = jnp.mean(y, axis=(0, 2, 3), keepdims=True)
    var = jnp.mean((y - mean) ** 2, axis=(0, 2, 3), keepdims=True)  # biased
    y = (y - mean) / jnp.sqrt(var + BN_EPS)
    y = y * gamma.reshape(1, -1, 1, 1) + beta.reshape(1, -1, 1, 1)
    return jnp.squeeze(jnp.mean(y, axis=(2, 3)))


if __name__ == "__main__":
    key = jax.random.PRNGKey(0)
    k_x, k_w = jax.random.split(key)

    N, C_IN, C_OUT, H, W = 2, 4, 8, 16, 16
    x = jax.random.normal(k_x, (N, C_IN, H, W), dtype=jnp.float32)

    # Deterministic params (shapes from nn.Conv2d / nn.BatchNorm2d defaults).
    conv_weight = jax.random.normal(k_w, (C_OUT, C_IN, 1, 1), dtype=jnp.float32) * 0.1
    gamma = jnp.ones((C_OUT,), dtype=jnp.float32)   # BN weight init
    beta = jnp.zeros((C_OUT,), dtype=jnp.float32)   # BN bias init

    ref = _reference(x, conv_weight, gamma, beta)

    # 1) auto config: one spatial tile, samples batched into a single block
    out_auto = jax.block_until_ready(conv1x1_forward(x, conv_weight, gamma, beta))
    # 2) explicit spatial tiling: exercises multi-step spatial accumulation
    out_tiled = jax.block_until_ready(
        conv1x1_forward(x, conv_weight, gamma, beta, tile_s=128))
    # 3) batched samples + spatial split: exercises the two-TC split path
    out_split = jax.block_until_ready(
        conv1x1_forward(x, conv_weight, gamma, beta, tile_s=128, b_tile=2))

    for out in (out_auto, out_tiled, out_split):
        assert out.shape == ref.shape, (out.shape, ref.shape)
        # Tolerance loosened vs f32 because matmul inputs are cast to bf16 in-kernel.
        assert jnp.allclose(out, ref, atol=1e-2, rtol=1e-2), \
            float(jnp.max(jnp.abs(out - ref)))

    print("KERNEL_OK")
</pallas_src>

<mosaic_0001>
module attributes {stable_mosaic.version = 11 : i64} {
  func.func @conv1x1_sums_kernel(%arg0: i32, %arg1: i32, %arg2: i32, %arg3: memref<2x4x256xf32, #tpu.memory_space<vmem>>, %arg4: memref<8x4xf32, #tpu.memory_space<vmem>>, %arg5: memref<1x2x8x1xf32, #tpu.memory_space<vmem>>, %arg6: memref<1x2x8x1xf32, #tpu.memory_space<vmem>>) attributes {dimension_semantics = [#tpu.dimension_semantics<parallel>, #tpu.dimension_semantics<parallel>, #tpu.dimension_semantics<arbitrary>], iteration_bounds = array<i64: 1, 1, 1>, scalar_prefetch = 0 : i64, scratch_operands = 0 : i64, tpu.core_type = #tpu.core_type<tc>, window_params = [{transform_indices = @transform_0, window_bounds = array<i64: 2, 4, 256>}, {pipeline_mode = #tpu.pipeline_mode<synchronous>, transform_indices = @transform_1, window_bounds = array<i64: 8, 4>}, {transform_indices = @transform_2, window_bounds = array<i64: 1, 2, 8, 1>}, {transform_indices = @transform_3, window_bounds = array<i64: 1, 2, 8, 1>}]} {
    %c0_i32 = arith.constant 0 : i32
    %0 = arith.cmpi eq, %arg2, %c0_i32 : i32
    %1 = arith.extui %0 : i1 to i32
    %c0_i32_0 = arith.constant 0 : i32
    %2 = arith.cmpi ne, %1, %c0_i32_0 : i32
    scf.if %2 {
      %cst_44 = arith.constant 0.000000e+00 : f32
      %47 = vector.broadcast %cst_44 : f32 to vector<1x2x8x1xf32>
      %c0_45 = arith.constant 0 : index
      %c0_46 = arith.constant 0 : index
      %c0_47 = arith.constant 0 : index
      %c0_48 = arith.constant 0 : index
      %48 = vector.load %arg5[%c0_45, %c0_46, %c0_47, %c0_48] : memref<1x2x8x1xf32, #tpu.memory_space<vmem>>, vector<1x2x8x1xf32>
      tpu.vector_store %arg5[%c0_45, %c0_46, %c0_47, %c0_48], %47 {strides = array<i32>} : memref<1x2x8x1xf32, #tpu.memory_space<vmem>>, vector<1x2x8x1xf32>,
      %cst_49 = arith.constant 0.000000e+00 : f32
      %49 = vector.broadcast %cst_49 : f32 to vector<1x2x8x1xf32>
      %c0_50 = arith.constant 0 : index
      %c0_51 = arith.constant 0 : index
      %c0_52 = arith.constant 0 : index
      %c0_53 = arith.constant 0 : index
      %50 = vector.load %arg6[%c0_50, %c0_51, %c0_52, %c0_53] : memref<1x2x8x1xf32, #tpu.memory_space<vmem>>, vector<1x2x8x1xf32>
      tpu.vector_store %arg6[%c0_50, %c0_51, %c0_52, %c0_53], %49 {strides = array<i32>} : memref<1x2x8x1xf32, #tpu.memory_space<vmem>>, vector<1x2x8x1xf32>,
    } else {
    }
    %c0 = arith.constant 0 : index
    %c0_1 = arith.constant 0 : index
    %3 = vector.load %arg4[%c0, %c0_1] : memref<8x4xf32, #tpu.memory_space<vmem>>, vector<8x4xf32>
    %4 = arith.truncf %3 : vector<8x4xf32> to vector<8x4xbf16>
    %c0_2 = arith.constant 0 : index
    %c0_3 = arith.constant 0 : index
    %c0_4 = arith.constant 0 : index
    %5 = vector.load %arg3[%c0_2, %c0_3, %c0_4] : memref<2x4x256xf32, #tpu.memory_space<vmem>>, vector<1x4x256xf32>
    %6 = vector.shape_cast %5 : vector<1x4x256xf32> to vector<4x256xf32>
    %7 = arith.truncf %6 : vector<4x256xf32> to vector<4x256xbf16>
    %cst = arith.constant dense<0.000000e+00> : vector<8x256xf32>
    %8 = tpu.matmul %4, %7, %cst {dimension_numbers = #tpu.dot_dimension_numbers<[1], [0], [0], [1], [0, 0, 1, 1], [], []>} : vector<8x4xbf16>, vector<4x256xbf16>, vector<8x256xf32> -> vector<8x256xf32>
    %c0_5 = arith.constant 0 : index
    %c0_6 = arith.constant 0 : index
    %c0_7 = arith.constant 0 : index
    %c0_8 = arith.constant 0 : index
    %9 = vector.load %arg5[%c0_5, %c0_6, %c0_7, %c0_8] : memref<1x2x8x1xf32, #tpu.memory_space<vmem>>, vector<1x1x8x1xf32>
    %10 = vector.shape_cast %9 : vector<1x1x8x1xf32> to vector<8x1xf32>
    %cst_9 = arith.constant dense<0.000000e+00> : vector<8xf32>
    %11 = vector.multi_reduction <add>, %8, %cst_9 [1] : vector<8x256xf32> to vector<8xf32>
    %12 = vector.shape_cast %11 : vector<8xf32> to vector<8x1xf32>
    %13 = arith.addf %10, %12 : vector<8x1xf32>
    %c0_10 = arith.constant 0 : index
    %c0_11 = arith.constant 0 : index
    %c0_12 = arith.constant 0 : index
    %c0_13 = arith.constant 0 : index
    %14 = vector.load %arg5[%c0_10, %c0_11, %c0_12, %c0_13] : memref<1x2x8x1xf32, #tpu.memory_space<vmem>>, vector<1x1x8x1xf32>
    %15 = vector.shape_cast %14 : vector<1x1x8x1xf32> to vector<8x1xf32>
    %16 = vector.shape_cast %13 : vector<8x1xf32> to vector<1x1x8x1xf32>
    tpu.vector_store %arg5[%c0_10, %c0_11, %c0_12, %c0_13], %16 {strides = array<i32>} : memref<1x2x8x1xf32, #tpu.memory_space<vmem>>, vector<1x1x8x1xf32>,
    %c0_14 = arith.constant 0 : index
    %c0_15 = arith.constant 0 : index
    %c0_16 = arith.constant 0 : index
    %c0_17 = arith.constant 0 : index
    %17 = vector.load %arg6[%c0_14, %c0_15, %c0_16, %c0_17] : memref<1x2x8x1xf32, #tpu.memory_space<vmem>>, vector<1x1x8x1xf32>
    %18 = vector.shape_cast %17 : vector<1x1x8x1xf32> to vector<8x1xf32>
    %19 = arith.mulf %8, %8 : vector<8x256xf32>
    %cst_18 = arith.constant dense<0.000000e+00> : vector<8xf32>
    %20 = vector.multi_reduction <add>, %19, %cst_18 [1] : vector<8x256xf32> to vector<8xf32>
    %21 = vector.shape_cast %20 : vector<8xf32> to vector<8x1xf32>
    %22 = arith.addf %18, %21 : vector<8x1xf32>
    %c0_19 = arith.constant 0 : index
    %c0_20 = arith.constant 0 : index
    %c0_21 = arith.constant 0 : index
    %c0_22 = arith.constant 0 : index
    %23 = vector.load %arg6[%c0_19, %c0_20, %c0_21, %c0_22] : memref<1x2x8x1xf32, #tpu.memory_space<vmem>>, vector<1x1x8x1xf32>
    %24 = vector.shape_cast %23 : vector<1x1x8x1xf32> to vector<8x1xf32>
    %25 = vector.shape_cast %22 : vector<8x1xf32> to vector<1x1x8x1xf32>
    tpu.vector_store %arg6[%c0_19, %c0_20, %c0_21, %c0_22], %25 {strides = array<i32>} : memref<1x2x8x1xf32, #tpu.memory_space<vmem>>, vector<1x1x8x1xf32>,
    %c1 = arith.constant 1 : index
    %c0_23 = arith.constant 0 : index
    %c0_24 = arith.constant 0 : index
    %26 = vector.load %arg3[%c1, %c0_23, %c0_24] : memref<2x4x256xf32, #tpu.memory_space<vmem>>, vector<1x4x256xf32>
    %27 = vector.shape_cast %26 : vector<1x4x256xf32> to vector<4x256xf32>
    %28 = arith.truncf %27 : vector<4x256xf32> to vector<4x256xbf16>
    %cst_25 = arith.constant dense<0.000000e+00> : vector<8x256xf32>
    %29 = tpu.matmul %4, %28, %cst_25 {dimension_numbers = #tpu.dot_dimension_numbers<[1], [0], [0], [1], [0, 0, 1, 1], [], []>} : vector<8x4xbf16>, vector<4x256xbf16>, vector<8x256xf32> -> vector<8x256xf32>
    %c0_26 = arith.constant 0 : index
    %c1_27 = arith.constant 1 : index
    %c0_28 = arith.constant 0 : index
    %c0_29 = arith.constant 0 : index
    %30 = vector.load %arg5[%c0_26, %c1_27, %c0_28, %c0_29] : memref<1x2x8x1xf32, #tpu.memory_space<vmem>>, vector<1x1x8x1xf32>
    %31 = vector.shape_cast %30 : vector<1x1x8x1xf32> to vector<8x1xf32>
    %cst_30 = arith.constant dense<0.000000e+00> : vector<8xf32>
    %32 = vector.multi_reduction <add>, %29, %cst_30 [1] : vector<8x256xf32> to vector<8xf32>
    %33 = vector.shape_cast %32 : vector<8xf32> to vector<8x1xf32>
    %34 = arith.addf %31, %33 : vector<8x1xf32>
    %c0_31 = arith.constant 0 : index
    %c1_32 = arith.constant 1 : index
    %c0_33 = arith.constant 0 : index
    %c0_34 = arith.constant 0 : index
    %35 = vector.load %arg5[%c0_31, %c1_32, %c0_33, %c0_34] : memref<1x2x8x1xf32, #tpu.memory_space<vmem>>, vector<1x1x8x1xf32>
    %36 = vector.shape_cast %35 : vector<1x1x8x1xf32> to vector<8x1xf32>
    %37 = vector.shape_cast %34 : vector<8x1xf32> to vector<1x1x8x1xf32>
    tpu.vector_store %arg5[%c0_31, %c1_32, %c0_33, %c0_34], %37 {strides = array<i32>} : memref<1x2x8x1xf32, #tpu.memory_space<vmem>>, vector<1x1x8x1xf32>,
    %c0_35 = arith.constant 0 : index
    %c1_36 = arith.constant 1 : index
    %c0_37 = arith.constant 0 : index
    %c0_38 = arith.constant 0 : index
    %38 = vector.load %arg6[%c0_35, %c1_36, %c0_37, %c0_38] : memref<1x2x8x1xf32, #tpu.memory_space<vmem>>, vector<1x1x8x1xf32>
    %39 = vector.shape_cast %38 : vector<1x1x8x1xf32> to vector<8x1xf32>
    %40 = arith.mulf %29, %29 : vector<8x256xf32>
    %cst_39 = arith.constant dense<0.000000e+00> : vector<8xf32>
    %41 = vector.multi_reduction <add>, %40, %cst_39 [1] : vector<8x256xf32> to vector<8xf32>
    %42 = vector.shape_cast %41 : vector<8xf32> to vector<8x1xf32>
    %43 = arith.addf %39, %42 : vector<8x1xf32>
    %c0_40 = arith.constant 0 : index
    %c1_41 = arith.constant 1 : index
    %c0_42 = arith.constant 0 : index
    %c0_43 = arith.constant 0 : index
    %44 = vector.load %arg6[%c0_40, %c1_41, %c0_42, %c0_43] : memref<1x2x8x1xf32, #tpu.memory_space<vmem>>, vector<1x1x8x1xf32>
    %45 = vector.shape_cast %44 : vector<1x1x8x1xf32> to vector<8x1xf32>
    %46 = vector.shape_cast %43 : vector<8x1xf32> to vector<1x1x8x1xf32>
    tpu.vector_store %arg6[%c0_40, %c1_41, %c0_42, %c0_43], %46 {strides = array<i32>} : memref<1x2x8x1xf32, #tpu.memory_space<vmem>>, vector<1x1x8x1xf32>,
    return
  }
  func.func @transform_0(%arg0: i32, %arg1: i32, %arg2: i32) -> (i32, i32, i32) {
    %c1_i32 = arith.constant 1 : i32
    %0 = arith.muli %arg0, %c1_i32 : i32
    %1 = arith.addi %0, %arg2 : i32
    %c0_i32 = arith.constant 0 : i32
    %c0_i32_0 = arith.constant 0 : i32
    return %arg1, %c0_i32, %1 : i32, i32, i32
  }
  func.func @transform_1(%arg0: i32, %arg1: i32, %arg2: i32) -> (i32, i32) {
    %c0_i32 = arith.constant 0 : i32
    %c0_i32_0 = arith.constant 0 : i32
    %c0_i32_1 = arith.constant 0 : i32
    return %c0_i32, %c0_i32_0 : i32, i32
  }
  func.func @transform_2(%arg0: i32, %arg1: i32, %arg2: i32) -> (i32, i32, i32, i32) {
    %c0_i32 = arith.constant 0 : i32
    %c0_i32_0 = arith.constant 0 : i32
    %c0_i32_1 = arith.constant 0 : i32
    return %arg0, %arg1, %c0_i32, %c0_i32_0 : i32, i32, i32, i32
  }
  func.func @transform_3(%arg0: i32, %arg1: i32, %arg2: i32) -> (i32, i32, i32, i32) {
    %c0_i32 = arith.constant 0 : i32
    %c0_i32_0 = arith.constant 0 : i32
    %c0_i32_1 = arith.constant 0 : i32
    return %arg0, %arg1, %c0_i32, %c0_i32_0 : i32, i32, i32, i32
  }
}

</mosaic_0001>

<llo_original>
// kernel: tpu_custom_call.1
$region0: #{tpu_custom_call.1}
  #allocation0 [shape = 'u32[]', space=smem, size = 0x4, offset = 0x4, fixed_abs, tag = 'smem constant byte address 0x4 - core index']
  #allocation1 [shape = 'u32[144,128]{1,0:T(1,128)}', space=vmem, size = 0x12000, scoped, tag = 'internal scratch']
  %s0 = inlined_call_operand.hbm [shape: f32[2,4,256], index: 0, kind: input, shape index: {}]
  %s1 = inlined_call_operand.vmem [shape: f32[8,4], index: 1, kind: input, shape index: {}]
  %s2 = inlined_call_operand.vmem [shape: f32[1,2,8,1], index: 2, kind: output, shape index: {0}]
  %s3 = inlined_call_operand.vmem [shape: f32[1,2,8,1], index: 3, kind: output, shape index: {1}]
  %4 = xla_tuple %s2, %s3
  %s5 = sld [smem:[#allocation0]]
  $region34: #{tpu_custom_call.1} parent=0
    _
  %s7 = ssub.s32 1, %s5
  %s8 = scalar_select 0, %s7, %s5
  $region1: #{tpu_custom_call.1} parent=0
    #allocation2 [shape = 'u8[8192]{0}', space=vmem, size = 0x2000, scoped, tag = 'input window, operand 0, single buffered']
    #allocation3 [shape = 's32[1]{0}', space=sflag, size = 0x4, scoped, tag = 'scoped memory for tpu_custom_call.1']
    %9 = vsyncpa [#allocation3], 0
    // Predicated region
    $region2: #{tpu_custom_call.1} parent=1 // pred_check
      _
    $region3: #{tpu_custom_call.1} parent=1 // pred_check_branch
      %11 = sbr.rel (0) target = $region5
    $region4: #{tpu_custom_call.1} parent=1 // pred_region
      %s12 = sadd.s32 0, 0
      %s13 = smul.u32 2, %s12
      %s15 = ssub.s32 256, 256
      %16 = vsyncadd [#allocation3], %s15
      %s17 = smul.addr %s13, 64
      %s18 = scalar_lea.hbm %s0, %s17
      %s19 = sshll.u32 [#allocation2], 4
      %s20 = int_to_ptr.vmem [resolvable:$true] %s19
      %25 = dma.hbm_to_vmem [thread:$0]  %s18, 256, %s20, [#allocation3], 128, 128, 8
    $region5: #{tpu_custom_call.1} parent=1 // pred_fallthru
      _
    // Predicated region
    $region6: #{tpu_custom_call.1} parent=1 // pred_check
      _
    $region7: #{tpu_custom_call.1} parent=1 // pred_check_branch
      %27 = sbr.rel (0) target = $region9
    $region8: #{tpu_custom_call.1} parent=1 // pred_region
      _
    $region9: #{tpu_custom_call.1} parent=1 // pred_fallthru
      _
    // Predicated region
    $region10: #{tpu_custom_call.1} parent=1 // pred_check
      _
    $region11: #{tpu_custom_call.1} parent=1 // pred_check_branch
      %29 = sbr.rel (0) target = $region13
    $region12: #{tpu_custom_call.1} parent=1 // pred_region
      %30 = dma.done [#allocation3], 256
    $region13: #{tpu_custom_call.1} parent=1 // pred_fallthru
      _
    %s31 = sadd.s32 0, 0
    %s32 = smul.u32 2, %s31
    %p34 = scmp.eq.s32.totalorder 0, 0
    // Predicated region
    $region14: #{tpu_custom_call.1} parent=1 // pred_check
      %p35 = pneg %p34
    $region15: #{tpu_custom_call.1} parent=1 // pred_check_branch
      %37 = sbr.rel (%p35) target = $region17
    $region16: #{tpu_custom_call.1} parent=1 // pred_region
      %vm38 = vcmask 7168
      %39 = vst.msk [vmem:[%s2] sm:$0xff] %vm38, 0.0
      %40 = vst.msk [vmem:[%s2 + $0x8] sm:$0xff] %vm38, 0.0
      %41 = vst.msk [vmem:[%s3] sm:$0xff] %vm38, 0.0
      %42 = vst.msk [vmem:[%s3 + $0x8] sm:$0xff] %vm38, 0.0
    $region17: #{tpu_custom_call.1} parent=1 // pred_fallthru
      _
    %v43 = vld [vmem:[%s1] sm:$0xff]
    %v44 = vpack.c.bf16 %v43, %v43
    %v45 = vld [vmem:[#allocation2] sm:$0xff]
    %v47 = vcombine.high %v45, %v45
    %v49 = vpack.c.bf16 %v45, %v45
    %v50 = vpack.c.bf16 %v47, %v47
    %vm51 = vcmask 31744
    %v53 = vsel %vm51, %v44, 0
    %vm55 = vcmask 1041408
    %v57 = vsel %vm55, %v49, 0
    %v60 = vsel %vm55, %v50, 0
    %62 = vmatprep.subr.bf16.mxu0 %v60
    %63 = vmatpush1.bf16.msra.mxu0 %v57
    %64 = vmatprep.subr.bf16.mxu0 0
    %65 = vmatpush1.bf16.msra.mxu0 0
    %66 = vmatprep.subr.bf16.mxu0 0
    %67 = vmatpush1.bf16.msra.mxu0 0
    %68 = vmatprep.subr.bf16.mxu0 0
    %69 = vmatpush1.bf16.msra.mxu0 0
    %70 = vmatprep.subr.bf16.mxu0 0
    %71 = vmatpush1.bf16.msra.mxu0 0
    %72 = vmatprep.subr.bf16.mxu0 0
    %73 = vmatpush1.bf16.msra.mxu0 0
    %74 = vmatprep.subr.bf16.mxu0 0
    %75 = vmatpush1.bf16.msra.mxu0 0
    %76 = vmatprep.subr.bf16.mxu0 0
    %77 = vmatpush1.bf16.msra.mxu0 0
    %78 = vmatprep.subr.bf16.mxu0 0
    %79 = vmatpush1.bf16.msra.mxu0 0
    %80 = vmatprep.subr.bf16.mxu0 0
    %81 = vmatpush1.bf16.msra.mxu0 0
    %82 = vmatprep.subr.bf16.mxu0 0
    %83 = vmatpush1.bf16.msra.mxu0 0
    %84 = vmatprep.subr.bf16.mxu0 0
    %85 = vmatpush1.bf16.msra.mxu0 0
    %86 = vmatprep.subr.bf16.mxu0 0
    %87 = vmatpush1.bf16.msra.mxu0 0
    %88 = vmatprep.subr.bf16.mxu0 0
    %89 = vmatpush1.bf16.msra.mxu0 0
    %90 = vmatprep.subr.bf16.mxu0 0
    %91 = vmatpush1.bf16.msra.mxu0 0
    %92 = vmatprep.subr.bf16.mxu0 0
    %93 = vmatpush1.bf16.msra.mxu0 0
    %94 = vmatprep.mubr.bf16.mxu0 0
    %95 = vmatmul.mubr.bf16.gmra.mrb[0].mxu0 %v53
    %v96 = vpop.f32.mrb[0].mxu0
    %v97 = vadd.f32 0.0, %v96
    %v98 = vpop.f32.mrb[0].mxu0
    %v99 = vadd.f32 0.0, %v98
    %v100 = vpop.f32.mrb[0].mxu0
    %v101 = vpop.f32.mrb[0].mxu0
    %102 = vdwg.mxu0
    %v103 = vld [vmem:[%s2] sm:$0xff]
    %v104 = vadd.f32 %v97, %v99
    %105 = vadd.xlane.f32.xlu0 %v104
    %v106 = vpop.xlane.xlu0 %105
    %v107 = vadd.f32 %v103, %v106
    %vm108 = vcmask 7168
    %109 = vst.msk [vmem:[%s2] sm:$0xff] %vm108, %v107
    %v110 = vld [vmem:[%s3] sm:$0xff]
    %v111 = vmul.f32 %v97, %v97
    %v112 = vmul.f32 %v99, %v99
    %v113 = vadd.f32 %v111, %v112
    %114 = vadd.xlane.f32.xlu0 %v113
    %v115 = vpop.xlane.xlu0 %114
    %v116 = vadd.f32 %v110, %v115
    %117 = vst.msk [vmem:[%s3] sm:$0xff] %vm108, %v116
    %s118 = scalar_lea.vmem [#allocation2], 8
    %v119 = vld [vmem:[%s118] sm:$0xff]
    %v121 = vcombine.high %v119, %v119
    %v123 = vpack.c.bf16 %v119, %v119
    %v124 = vpack.c.bf16 %v121, %v121
    %v126 = vsel %vm55, %v123, 0
    %v129 = vsel %vm55, %v124, 0
    %131 = vmatprep.subr.bf16.mxu0 %v129
    %132 = vmatpush1.bf16.msra.mxu0 %v126
    %133 = vmatprep.subr.bf16.mxu0 0
    %134 = vmatpush1.bf16.msra.mxu0 0
    %135 = vmatprep.subr.bf16.mxu0 0
    %136 = vmatpush1.bf16.msra.mxu0 0
    %137 = vmatprep.subr.bf16.mxu0 0
    %138 = vmatpush1.bf16.msra.mxu0 0
    %139 = vmatprep.subr.bf16.mxu0 0
    %140 = vmatpush1.bf16.msra.mxu0 0
    %141 = vmatprep.subr.bf16.mxu0 0
    %142 = vmatpush1.bf16.msra.mxu0 0
    %143 = vmatprep.subr.bf16.mxu0 0
    %144 = vmatpush1.bf16.msra.mxu0 0
    %145 = vmatprep.subr.bf16.mxu0 0
    %146 = vmatpush1.bf16.msra.mxu0 0
    %147 = vmatprep.subr.bf16.mxu0 0
    %148 = vmatpush1.bf16.msra.mxu0 0
    %149 = vmatprep.subr.bf16.mxu0 0
    %150 = vmatpush1.bf16.msra.mxu0 0
    %151 = vmatprep.subr.bf16.mxu0 0
    %152 = vmatpush1.bf16.msra.mxu0 0
    %153 = vmatprep.subr.bf16.mxu0 0
    %154 = vmatpush1.bf16.msra.mxu0 0
    %155 = vmatprep.subr.bf16.mxu0 0
    %156 = vmatpush1.bf16.msra.mxu0 0
    %157 = vmatprep.subr.bf16.mxu0 0
    %158 = vmatpush1.bf16.msra.mxu0 0
    %159 = vmatprep.subr.bf16.mxu0 0
    %160 = vmatpush1.bf16.msra.mxu0 0
    %161 = vmatprep.subr.bf16.mxu0 0
    %162 = vmatpush1.bf16.msra.mxu0 0
    %163 = vmatprep.mubr.bf16.mxu0 0
    %164 = vmatmul.mubr.bf16.gmra.mrb[0].mxu0 %v53
    %v165 = vpop.f32.mrb[0].mxu0
    %v166 = vadd.f32 0.0, %v165
    %v167 = vpop.f32.mrb[0].mxu0
    %v168 = vadd.f32 0.0, %v167
    %v169 = vpop.f32.mrb[0].mxu0
    %v170 = vpop.f32.mrb[0].mxu0
    %171 = vdwg.mxu0
    %s172 = scalar_lea.vmem %s2, 8
    %v173 = vld [vmem:[%s172] sm:$0xff]
    %v174 = vadd.f32 %v166, %v168
    %175 = vadd.xlane.f32.xlu0 %v174
    %v176 = vpop.xlane.xlu0 %175
    %v177 = vadd.f32 %v173, %v176
    %178 = vst.msk [vmem:[%s172] sm:$0xff] %vm108, %v177
    %s179 = scalar_lea.vmem %s3, 8
    %v180 = vld [vmem:[%s179] sm:$0xff]
    %v181 = vmul.f32 %v166, %v166
    %v182 = vmul.f32 %v168, %v168
    %v183 = vadd.f32 %v181, %v182
    %184 = vadd.xlane.f32.xlu0 %v183
    %v185 = vpop.xlane.xlu0 %184
    %v186 = vadd.f32 %v180, %v185
    %187 = vst.msk [vmem:[%s179] sm:$0xff] %vm108, %v186
    // Predicated region
    $region18: #{tpu_custom_call.1} parent=1 // pred_check
      _
    $region19: #{tpu_custom_call.1} parent=1 // pred_check_branch
      %189 = sbr.rel (0) target = $region21
    $region20: #{tpu_custom_call.1} parent=1 // pred_region
      _
    $region21: #{tpu_custom_call.1} parent=1 // pred_fallthru
      _
    // Predicated region
    $region22: #{tpu_custom_call.1} parent=1 // pred_check
      _
    $region23: #{tpu_custom_call.1} parent=1 // pred_check_branch
      %191 = sbr.rel (0) target = $region25
    $region24: #{tpu_custom_call.1} parent=1 // pred_region
      _
    $region25: #{tpu_custom_call.1} parent=1 // pred_fallthru
      _
    // Predicated region
    $region26: #{tpu_custom_call.1} parent=1 // pred_check
      _
    $region27: #{tpu_custom_call.1} parent=1 // pred_check_branch
      %193 = sbr.rel (0) target = $region29
    $region28: #{tpu_custom_call.1} parent=1 // pred_region
      _
    $region29: #{tpu_custom_call.1} parent=1 // pred_fallthru
      _
    // Predicated region
    $region30: #{tpu_custom_call.1} parent=1 // pred_check
      _
    $region31: #{tpu_custom_call.1} parent=1 // pred_check_branch
      %195 = sbr.rel (0) target = $region33
    $region32: #{tpu_custom_call.1} parent=1 // pred_region
      _
    $region33: #{tpu_custom_call.1} parent=1 // pred_fallthru
      _
    %196 = vsyncpa [#allocation3], 1

</llo_original>
